<compile_context>
chip_gen: v5e
topology: v5e:2x2
jax: 0.10.0
libtpu: 0.0.40
codegen_flags: <defaults>
</compile_context>

<pallas_src>
import jax
import jax.numpy as jnp
from jax.experimental import pallas as pl
from jax.experimental.pallas import tpu as pltpu

EPS = 1e-5
MXU_DTYPE = jnp.bfloat16


# ----------------------------- small helpers ------------------------------ #

def _round_up(v, m):
    return (v + m - 1) // m * m


def _cdiv(a, b):
    return -(-a // b)


def _pad2(a, rows, cols):
    pr, pc = rows - a.shape[0], cols - a.shape[1]
    if pr == 0 and pc == 0:
        return a
    return jnp.pad(a, ((0, pr), (0, pc)))


def _physical_vmem_bytes():
    """Per-generation VMEM capacity; conservative fallback (v7x = 64 MiB)."""
    try:
        info = pltpu.get_tpu_info()
        for attr in ("vmem_capacity_bytes", "vmem_bytes"):
            v = getattr(info, attr, None)
            if v:
                return int(v)
    except Exception:
        pass
    return 64 * 1024 * 1024


def _pick_tiling(n_rows, f_in, h1_p, h2_p, f_out, out_bytes, vmem_bytes,
                 resident_bytes):
    """Row tiling + vmem_limit derived from a single consistent budget."""
    vmem_limit = int(min(vmem_bytes, 128 * 1024 * 1024) * 3 // 4)
    headroom = (8 if vmem_bytes <= 64 * 1024 * 1024 else 16) * 1024 * 1024
    # Constant-index_map ("resident") blocks may still be double-buffered by the
    # pipeliner -> budget them at 2x.
    budget = vmem_limit - 2 * resident_bytes - headroom
    # TODO(synk): when 2*resident_bytes overflows the budget (very large hidden
    # dims, esp. on 64 MiB v7x), fall back to K/N-tiled weights with a VMEM f32
    # accumulator instead of shrinking tile_n.
    budget = max(budget, 4 * 1024 * 1024)
    per_row = (2 * f_in * 4              # f32 x tile (pass 1), double-buffered
               + 2 * f_in * 2            # bf16 x tile (out of pass 1 / in 2,3)
               + 2 * f_out * out_bytes   # output tile, double-buffered
               + 4 * (h1_p + h2_p) * 4)  # f32 intermediates (t1, h1, t2, h2)
    cap = max(16, min(int(budget // max(per_row, 1)), 1024))
    # Rebalance so that n barely above the cap does not ~double the padded rows.
    n_tiles = max(1, _cdiv(n_rows, cap))
    tile_n = _round_up(_cdiv(n_rows, n_tiles), 16)   # bf16 (16,128) packing
    return tile_n, n_tiles, vmem_limit


def _finalize_affine(partials, gamma, beta, n_valid):
    """Tiny JAX finalize: per-tile [sum; sum_sq] -> folded BN affine (2, H)."""
    s = jnp.sum(partials, axis=0)                       # (2, H) f32
    mean = s[0:1] / n_valid
    # E[t^2]-E[t]^2 can cancel slightly negative in f32 -> clamp before rsqrt.
    var = jnp.maximum(s[1:2] / n_valid - mean * mean, 0.0)
    scale = gamma * jax.lax.rsqrt(var + EPS)
    shift = beta - mean * scale
    return jnp.concatenate([scale, shift], axis=0)      # (2, H) f32


# ------------------------------- kernels ----------------------------------- #

def _make_stats1_kernel(tile_n, n_valid, needs_mask):
    """Pass 1: cast x to bf16 (re-emitted for passes 2/3) and write this tile's
    partial [sum; sum_sq] of the layer-1 pre-activation."""

    def kernel(x_ref, w1_ref, b1_ref, xp_ref, st_ref):
        xb = x_ref[...].astype(MXU_DTYPE)
        xp_ref[...] = xb          # fused pad/cast: padded rows are already zero
        t = jnp.dot(xb, w1_ref[...],
                    preferred_element_type=jnp.float32) + b1_ref[...]

        def acc(tv):
            st_ref[:, 0:1, :] = jnp.sum(tv, axis=0, keepdims=True)[None]
            st_ref[:, 1:2, :] = jnp.sum(tv * tv, axis=0, keepdims=True)[None]

        if needs_mask:
            i = pl.program_id(0)
            last = pl.num_programs(0) - 1

            @pl.when(i < last)
            def _():
                acc(t)

            @pl.when(i == last)      # only the last tile has padded rows
            def _():
                row = (jax.lax.broadcasted_iota(jnp.int32, (tile_n, 1), 0)
                       + i * tile_n)
                acc(jnp.where(row < n_valid, t, 0.0))
        else:
            acc(t)

    return kernel


def _make_stats2_kernel(tile_n, n_valid, needs_mask):
    """Pass 2: re-run layer 1 with its folded affine, write this tile's partial
    [sum; sum_sq] of the layer-2 pre-activation."""

    def kernel(x_ref, w1_ref, b1_ref, a1_ref, w2_ref, b2_ref, st_ref):
        t1 = jnp.dot(x_ref[...], w1_ref[...],
                     preferred_element_type=jnp.float32) + b1_ref[...]
        h1 = jnp.maximum(t1 * a1_ref[0:1, :] + a1_ref[1:2, :], 0.0)
        t2 = jnp.dot(h1.astype(w2_ref.dtype), w2_ref[...],
                     preferred_element_type=jnp.float32) + b2_ref[...]

        def acc(tv):
            st_ref[:, 0:1, :] = jnp.sum(tv, axis=0, keepdims=True)[None]
            st_ref[:, 1:2, :] = jnp.sum(tv * tv, axis=0, keepdims=True)[None]

        if needs_mask:
            i = pl.program_id(0)
            last = pl.num_programs(0) - 1

            @pl.when(i < last)
            def _():
                acc(t2)

            @pl.when(i == last)
            def _():
                row = (jax.lax.broadcasted_iota(jnp.int32, (tile_n, 1), 0)
                       + i * tile_n)
                acc(jnp.where(row < n_valid, t2, 0.0))
        else:
            acc(t2)

    return kernel


def _forward_kernel(x_ref, w1_ref, b1_ref, a1_ref, w2_ref, b2_ref, a2_ref,
                    w3_ref, b3_ref, o_ref):
    """Pass 3: fully fused forward using the precomputed folded BN affines.
    Row tiles are independent -> 'parallel' grid axis."""
    # TODO(synk): for large f_in/h1 (MXU-bound sizes) cache h1 from pass 2
    # instead of recomputing x@W1 here; keep recompute-from-x for small dims.
    t1 = jnp.dot(x_ref[...], w1_ref[...],
                 preferred_element_type=jnp.float32) + b1_ref[...]
    h1 = jnp.maximum(t1 * a1_ref[0:1, :] + a1_ref[1:2, :], 0.0)
    t2 = jnp.dot(h1.astype(w2_ref.dtype), w2_ref[...],
                 preferred_element_type=jnp.float32) + b2_ref[...]
    h2 = jnp.maximum(t2 * a2_ref[0:1, :] + a2_ref[1:2, :], 0.0)
    o = jnp.dot(h2.astype(w3_ref.dtype), w3_ref[...],
                preferred_element_type=jnp.float32) + b3_ref[...]
    o_ref[...] = o.astype(o_ref.dtype)


# ------------------------------- wrapper ----------------------------------- #

def mlp_forward(x, params):
    """x: [N, F] or [B, S, F]  (matches MLP.forward view semantics)."""
    orig_shape = None
    if x.ndim == 3:
        s1, s2, s3 = x.shape
        orig_shape = (s1, s2)
        x = x.reshape(s1 * s2, s3)
    out_dtype = x.dtype

    (w1, b1, g1, be1, w2, b2, g2, be2, w3, b3) = params
    n, f_in = x.shape
    h1, h2, f_out = w1.shape[1], w2.shape[1], w3.shape[1]

    # Only the hidden (matmul-output / BN) dims are padded lane-dense; the input
    # feature and final output dims stay unpadded (full-dim blocks => no extra
    # HBM traffic; the MXU tolerates unaligned K/N).
    # TODO(synk): pad hidden dims > 128 to multiples of 256 on v6e/v7x (256x256 MXU).
    h1_p, h2_p = _round_up(h1, 128), _round_up(h2, 128)

    in_b = jnp.dtype(MXU_DTYPE).itemsize
    resident_bytes = (in_b * (f_in * h1_p + h1_p * h2_p + h2_p * f_out)
                      + 4 * (5 * h1_p + 5 * h2_p + f_out))
    vmem = _physical_vmem_bytes()
    tile_n, n_tiles, vmem_limit = _pick_tiling(
        n, f_in, h1_p, h2_p, f_out, jnp.dtype(out_dtype).itemsize, vmem,
        resident_bytes)
    n_pad = tile_n * n_tiles
    needs_mask = (n_pad != n)

    # Parameters: pad + cast once.  Padded rows/cols are exact zeros, so they
    # stay zero through every layer and never perturb real-column statistics.
    w1p = _pad2(w1, f_in, h1_p).astype(MXU_DTYPE)
    w2p = _pad2(w2, h1_p, h2_p).astype(MXU_DTYPE)
    w3p = _pad2(w3, h2_p, f_out).astype(MXU_DTYPE)
    b1p = _pad2(b1, 1, h1_p).astype(jnp.float32)
    g1p = _pad2(g1, 1, h1_p).astype(jnp.float32)
    be1p = _pad2(be1, 1, h1_p).astype(jnp.float32)
    b2p = _pad2(b2, 1, h2_p).astype(jnp.float32)
    g2p = _pad2(g2, 1, h2_p).astype(jnp.float32)
    be2p = _pad2(be2, 1, h2_p).astype(jnp.float32)
    b3p = b3.astype(jnp.float32)

    # x: only row padding (zeros) when needed; bf16 cast happens inside pass 1.
    x_f32 = x.astype(jnp.float32)
    if needs_mask:
        x_f32 = jnp.pad(x_f32, ((0, n_pad - n), (0, 0)))

    row_spec = pl.BlockSpec((tile_n, f_in), lambda i: (i, 0))

    def full(a):  # small tensor kept VMEM-resident across all grid steps
        return pl.BlockSpec(a.shape, lambda i: (0,) * a.ndim)

    cp = pltpu.CompilerParams(dimension_semantics=("parallel",),
                              vmem_limit_bytes=vmem_limit)

    # Pass 1: bf16 cast of x (re-used by passes 2/3) + per-tile layer-1 stats.
    x_bf16, part1 = pl.pallas_call(
        _make_stats1_kernel(tile_n, n, needs_mask),
        out_shape=(jax.ShapeDtypeStruct((n_pad, f_in), MXU_DTYPE),
                   jax.ShapeDtypeStruct((n_tiles, 2, h1_p), jnp.float32)),
        grid_spec=pltpu.PrefetchScalarGridSpec(
            num_scalar_prefetch=0, grid=(n_tiles,),
            in_specs=[row_spec, full(w1p), full(b1p)],
            out_specs=[row_spec,
                       pl.BlockSpec((1, 2, h1_p), lambda i: (i, 0, 0))]),
        compiler_params=cp,
    )(x_f32, w1p, b1p)

    affine1 = _finalize_affine(part1, g1p, be1p, n)

    # Pass 2: per-tile layer-2 stats.
    part2 = pl.pallas_call(
        _make_stats2_kernel(tile_n, n, needs_mask),
        out_shape=jax.ShapeDtypeStruct((n_tiles, 2, h2_p), jnp.float32),
        grid_spec=pltpu.PrefetchScalarGridSpec(
            num_scalar_prefetch=0, grid=(n_tiles,),
            in_specs=[row_spec, full(w1p), full(b1p), full(affine1),
                      full(w2p), full(b2p)],
            out_specs=pl.BlockSpec((1, 2, h2_p), lambda i: (i, 0, 0))),
        compiler_params=cp,
    )(x_bf16, w1p, b1p, affine1, w2p, b2p)

    affine2 = _finalize_affine(part2, g2p, be2p, n)

    # Pass 3: fused forward; output emitted directly in caller dtype with
    # unpadded feature width (no padded f32 slab to slice/cast afterwards).
    out_p = pl.pallas_call(
        _forward_kernel,
        out_shape=jax.ShapeDtypeStruct((n_pad, f_out), out_dtype),
        grid_spec=pltpu.PrefetchScalarGridSpec(
            num_scalar_prefetch=0, grid=(n_tiles,),
            in_specs=[row_spec, full(w1p), full(b1p), full(affine1),
                      full(w2p), full(b2p), full(affine2), full(w3p),
                      full(b3p)],
            out_specs=pl.BlockSpec((tile_n, f_out), lambda i: (i, 0))),
        compiler_params=cp,
    )(x_bf16, w1p, b1p, affine1, w2p, b2p, affine2, w3p, b3p)

    out = out_p[:n] if needs_mask else out_p
    if orig_shape is not None:
        out = out.reshape(orig_shape[0], orig_shape[1], -1)
    return out
    # TODO(synk): BatchNorm1d training mode also updates running_mean/var
    # (momentum=0.1); only the forward output is produced here.


# ------------------------- params / reference ------------------------------ #

def init_params(key, input_size, arch, output_size, init_w=0.02):
    """Deterministic init matching MLP.init_weights:
       Linear/BN weights ~ N(0, init_w), biases = 0 (BN beta = 0)."""
    layer_sizes = [input_size] + [int(s) for s in arch.split('-')]
    params = []
    keys = jax.random.split(key, 8)
    ki = 0
    for i in range(len(layer_sizes) - 1):
        fin, fout = layer_sizes[i], layer_sizes[i + 1]
        w = init_w * jax.random.normal(keys[ki], (fin, fout), jnp.float32); ki += 1
        b = jnp.zeros((1, fout), jnp.float32)
        gamma = init_w * jax.random.normal(keys[ki], (1, fout), jnp.float32); ki += 1
        beta = jnp.zeros((1, fout), jnp.float32)
        params += [w, b, gamma, beta]
    fin, fout = layer_sizes[-1], output_size
    w = init_w * jax.random.normal(keys[ki], (fin, fout), jnp.float32); ki += 1
    b = jnp.zeros((1, fout), jnp.float32)
    params += [w, b]
    return tuple(params)


def _reference(x, params):
    """Pure-JAX reference using the same bf16-MXU / f32-BN numerics."""
    if x.ndim == 3:
        s1, s2, s3 = x.shape
        x = x.reshape(s1 * s2, s3)
        back = (s1, s2)
    else:
        back = None
    out_dtype = x.dtype
    (w1, b1, g1, be1, w2, b2, g2, be2, w3, b3) = params

    def dot(a, w):
        return jnp.dot(a.astype(MXU_DTYPE), w.astype(MXU_DTYPE),
                       preferred_element_type=jnp.float32)

    def bn_relu(t, g, be):
        m = jnp.mean(t, axis=0, keepdims=True)
        v = jnp.maximum(jnp.mean(t * t, axis=0, keepdims=True) - m * m, 0.0)
        scale = g * jax.lax.rsqrt(v + EPS)
        return jnp.maximum(t * scale + (be - m * scale), 0.0)

    h = bn_relu(dot(x, w1) + b1, g1, be1)
    h = bn_relu(dot(h, w2) + b2, g2, be2)
    out = (dot(h, w3) + b3).astype(out_dtype)
    if back is not None:
        out = out.reshape(back[0], back[1], -1)
    return out


if __name__ == "__main__":
    key = jax.random.PRNGKey(0)
    k_x, k_p = jax.random.split(key)

    input_size, arch, output_size = 16, "32-32", 8
    # 3-D input exercises the view(sz1*sz2, sz3) path: (batch=2, seq=8, feat=16)
    x = jax.random.normal(k_x, (2, 8, input_size), jnp.float32)
    params = init_params(k_p, input_size, arch, output_size, init_w=0.02)

    out = jax.block_until_ready(mlp_forward(x, params))
    ref = jax.block_until_ready(_reference(x, params))

    assert out.shape == (2, 8, output_size), out.shape
    assert jnp.allclose(out, ref, atol=5e-5, rtol=1e-3), \
        float(jnp.max(jnp.abs(out - ref)))

    print("KERNEL_OK")
</pallas_src>

<mosaic_0001>
module attributes {stable_mosaic.version = 11 : i64} {
  func.func @kernel(%arg0: i32, %arg1: memref<16x16xf32, #tpu.memory_space<vmem>>, %arg2: memref<16x128xbf16, #tpu.memory_space<vmem>>, %arg3: memref<1x128xf32, #tpu.memory_space<vmem>>, %arg4: memref<16x16xbf16, #tpu.memory_space<vmem>>, %arg5: memref<1x2x128xf32, #tpu.memory_space<vmem>>) attributes {dimension_semantics = [#tpu.dimension_semantics<parallel>], iteration_bounds = array<i64: 1>, scalar_prefetch = 0 : i64, scratch_operands = 0 : i64, tpu.core_type = #tpu.core_type<tc>, window_params = [{transform_indices = @transform_0, window_bounds = array<i64: 16, 16>}, {pipeline_mode = #tpu.pipeline_mode<synchronous>, transform_indices = @transform_1, window_bounds = array<i64: 16, 128>}, {pipeline_mode = #tpu.pipeline_mode<synchronous>, transform_indices = @transform_2, window_bounds = array<i64: 1, 128>}, {transform_indices = @transform_3, window_bounds = array<i64: 16, 16>}, {transform_indices = @transform_4, window_bounds = array<i64: 1, 2, 128>}]} {
    %c0 = arith.constant 0 : index
    %c0_0 = arith.constant 0 : index
    %0 = vector.load %arg1[%c0, %c0_0] : memref<16x16xf32, #tpu.memory_space<vmem>>, vector<16x16xf32>
    %1 = arith.truncf %0 : vector<16x16xf32> to vector<16x16xbf16>
    %c0_1 = arith.constant 0 : index
    %c0_2 = arith.constant 0 : index
    %2 = vector.load %arg4[%c0_1, %c0_2] : memref<16x16xbf16, #tpu.memory_space<vmem>>, vector<16x16xbf16>
    tpu.vector_store %arg4[%c0_1, %c0_2], %1 {strides = array<i32>} : memref<16x16xbf16, #tpu.memory_space<vmem>>, vector<16x16xbf16>,
    %c0_3 = arith.constant 0 : index
    %c0_4 = arith.constant 0 : index
    %3 = vector.load %arg2[%c0_3, %c0_4] : memref<16x128xbf16, #tpu.memory_space<vmem>>, vector<16x128xbf16>
    %cst = arith.constant dense<0.000000e+00> : vector<16x128xf32>
    %4 = tpu.matmul %1, %3, %cst {dimension_numbers = #tpu.dot_dimension_numbers<[1], [0], [0], [1], [0, 0, 1, 1], [], []>} : vector<16x16xbf16>, vector<16x128xbf16>, vector<16x128xf32> -> vector<16x128xf32>
    %c0_5 = arith.constant 0 : index
    %c0_6 = arith.constant 0 : index
    %5 = vector.load %arg3[%c0_5, %c0_6] : memref<1x128xf32, #tpu.memory_space<vmem>>, vector<1x128xf32>
    %6 = vector.broadcast %5 : vector<1x128xf32> to vector<16x128xf32>
    %7 = arith.addf %4, %6 : vector<16x128xf32>
    %cst_7 = arith.constant dense<0.000000e+00> : vector<128xf32>
    %8 = vector.multi_reduction <add>, %7, %cst_7 [0] : vector<16x128xf32> to vector<128xf32>
    %9 = vector.shape_cast %8 : vector<128xf32> to vector<1x128xf32>
    %10 = vector.shape_cast %9 : vector<1x128xf32> to vector<1x1x128xf32>
    %c0_8 = arith.constant 0 : index
    %c0_9 = arith.constant 0 : index
    %c0_10 = arith.constant 0 : index
    %11 = vector.load %arg5[%c0_8, %c0_9, %c0_10] : memref<1x2x128xf32, #tpu.memory_space<vmem>>, vector<1x1x128xf32>
    tpu.vector_store %arg5[%c0_8, %c0_9, %c0_10], %10 {strides = array<i32>} : memref<1x2x128xf32, #tpu.memory_space<vmem>>, vector<1x1x128xf32>,
    %12 = arith.mulf %7, %7 : vector<16x128xf32>
    %cst_11 = arith.constant dense<0.000000e+00> : vector<128xf32>
    %13 = vector.multi_reduction <add>, %12, %cst_11 [0] : vector<16x128xf32> to vector<128xf32>
    %14 = vector.shape_cast %13 : vector<128xf32> to vector<1x128xf32>
    %15 = vector.shape_cast %14 : vector<1x128xf32> to vector<1x1x128xf32>
    %c0_12 = arith.constant 0 : index
    %c1 = arith.constant 1 : index
    %c0_13 = arith.constant 0 : index
    %16 = vector.load %arg5[%c0_12, %c1, %c0_13] : memref<1x2x128xf32, #tpu.memory_space<vmem>>, vector<1x1x128xf32>
    tpu.vector_store %arg5[%c0_12, %c1, %c0_13], %15 {strides = array<i32>} : memref<1x2x128xf32, #tpu.memory_space<vmem>>, vector<1x1x128xf32>,
    return
  }
  func.func @transform_0(%arg0: i32) -> (i32, i32) {
    %c0_i32 = arith.constant 0 : i32
    %c0_i32_0 = arith.constant 0 : i32
    return %arg0, %c0_i32 : i32, i32
  }
  func.func @transform_1(%arg0: i32) -> (i32, i32) {
    %c0_i32 = arith.constant 0 : i32
    %c0_i32_0 = arith.constant 0 : i32
    %c0_i32_1 = arith.constant 0 : i32
    return %c0_i32, %c0_i32_0 : i32, i32
  }
  func.func @transform_2(%arg0: i32) -> (i32, i32) {
    %c0_i32 = arith.constant 0 : i32
    %c0_i32_0 = arith.constant 0 : i32
    %c0_i32_1 = arith.constant 0 : i32
    return %c0_i32, %c0_i32_0 : i32, i32
  }
  func.func @transform_3(%arg0: i32) -> (i32, i32) {
    %c0_i32 = arith.constant 0 : i32
    %c0_i32_0 = arith.constant 0 : i32
    return %arg0, %c0_i32 : i32, i32
  }
  func.func @transform_4(%arg0: i32) -> (i32, i32, i32) {
    %c0_i32 = arith.constant 0 : i32
    %c0_i32_0 = arith.constant 0 : i32
    %c0_i32_1 = arith.constant 0 : i32
    return %arg0, %c0_i32, %c0_i32_0 : i32, i32, i32
  }
}

</mosaic_0001>

<llo_original>
// kernel: tpu_custom_call.1
$region0: #{tpu_custom_call.1}
  #allocation0 [shape = 'u32[]', space=smem, size = 0x4, offset = 0x4, fixed_abs, tag = 'smem constant byte address 0x4 - core index']
  #allocation1 [shape = 'u32[72,128]{1,0:T(1,128)}', space=vmem, size = 0x9000, scoped, tag = 'internal scratch']
  %s0 = inlined_call_operand.hbm [shape: f32[16,16], index: 0, kind: input, shape index: {}]
  %s1 = inlined_call_operand.hbm [shape: bf16[16,128], index: 1, kind: input, shape index: {}]
  %s2 = inlined_call_operand.vmem [shape: f32[1,128], index: 2, kind: input, shape index: {}]
  %s3 = inlined_call_operand.hbm [shape: bf16[16,16], index: 3, kind: output, shape index: {0}]
  %s4 = inlined_call_operand.hbm [shape: f32[1,2,128], index: 4, kind: output, shape index: {1}]
  %5 = xla_tuple %s3, %s4
  %s6 = sld [smem:[#allocation0]]
  $region38: #{tpu_custom_call.1} parent=0
    _
  %s8 = ssub.s32 1, %s6
  %s9 = scalar_select 0, %s8, %s6
  $region1: #{tpu_custom_call.1} parent=0
    #allocation2 [shape = 'u8[8192]{0}', space=vmem, size = 0x2000, scoped, tag = 'input window, operand 0, single buffered']
    #allocation3 [shape = 's32[1]{0}', space=sflag, size = 0x4, scoped, tag = 'scoped memory for tpu_custom_call.1']
    #allocation4 [shape = 's32[1]{0}', space=sflag, size = 0x4, scoped, tag = 'scoped memory for tpu_custom_call.1']
    #allocation5 [shape = 'u8[4096]{0}', space=vmem, size = 0x1000, scoped, tag = 'input window, operand 1, single buffered']
    #allocation6 [shape = 's32[1]{0}', space=sflag, size = 0x4, scoped, tag = 'scoped memory for tpu_custom_call.1']
    #allocation7 [shape = 'u8[4096]{0}', space=vmem, size = 0x1000, scoped, tag = 'output window, operand 0, single buffered']
    #allocation8 [shape = 'u8[1024]{0}', space=vmem, size = 0x400, scoped, tag = 'output window, operand 1, single buffered']
    #allocation9 [shape = 's32[1]{0}', space=sflag, size = 0x4, scoped, tag = 'scoped memory for tpu_custom_call.1']
    %10 = vsyncpa [#allocation3], 0
    %11 = vsyncpa [#allocation6], 0
    %12 = vsyncpa [#allocation4], 0
    %13 = vsyncpa [#allocation9], 0
    // Predicated region
    $region2: #{tpu_custom_call.1} parent=1 // pred_check
      _
    $region3: #{tpu_custom_call.1} parent=1 // pred_check_branch
      %15 = sbr.rel (0) target = $region5
    $region4: #{tpu_custom_call.1} parent=1 // pred_region
      %17 = vsyncadd [#allocation3], 0
      %s18 = sshll.u32 %s0, 4
      %s19 = int_to_ptr.hbm [resolvable:$true] %s18
      %s20 = sshll.u32 [#allocation2], 4
      %s21 = int_to_ptr.vmem [resolvable:$true] %s20
      %26 = dma.hbm_to_vmem [thread:$0]  %s19, 256, %s21, [#allocation3], 128, 128, 8
    $region5: #{tpu_custom_call.1} parent=1 // pred_fallthru
      _
    // Predicated region
    $region6: #{tpu_custom_call.1} parent=1 // pred_check
      _
    $region7: #{tpu_custom_call.1} parent=1 // pred_check_branch
      %28 = sbr.rel (0) target = $region9
    $region8: #{tpu_custom_call.1} parent=1 // pred_region
      %30 = vsyncadd [#allocation6], 0
      %s31 = sshll.u32 %s1, 4
      %s32 = int_to_ptr.hbm [resolvable:$true] %s31
      %s33 = sshll.u32 [#allocation5], 4
      %s34 = int_to_ptr.vmem [resolvable:$true] %s33
      %39 = dma.hbm_to_vmem [thread:$0]  %s32, 128, %s34, [#allocation6], 64, 64, 4
    $region9: #{tpu_custom_call.1} parent=1 // pred_fallthru
      _
    // Predicated region
    $region10: #{tpu_custom_call.1} parent=1 // pred_check
      _
    $region11: #{tpu_custom_call.1} parent=1 // pred_check_branch
      %41 = sbr.rel (0) target = $region13
    $region12: #{tpu_custom_call.1} parent=1 // pred_region
      _
    $region13: #{tpu_custom_call.1} parent=1 // pred_fallthru
      _
    // Predicated region
    $region14: #{tpu_custom_call.1} parent=1 // pred_check
      _
    $region15: #{tpu_custom_call.1} parent=1 // pred_check_branch
      %43 = sbr.rel (0) target = $region17
    $region16: #{tpu_custom_call.1} parent=1 // pred_region
      %45 = dma.done [#allocation3], 256
    $region17: #{tpu_custom_call.1} parent=1 // pred_fallthru
      _
    // Predicated region
    $region18: #{tpu_custom_call.1} parent=1 // pred_check
      _
    $region19: #{tpu_custom_call.1} parent=1 // pred_check_branch
      %47 = sbr.rel (0) target = $region21
    $region20: #{tpu_custom_call.1} parent=1 // pred_region
      %49 = dma.done [#allocation6], 128
    $region21: #{tpu_custom_call.1} parent=1 // pred_fallthru
      _
    %v51 = vld [vmem:[#allocation2] sm:$0xff]
    %v52 = vld [vmem:[#allocation2 + $0x8] sm:$0xff]
    %v53 = vpack.c.bf16 %v51, %v51
    %v54 = vpack.c.bf16 %v52, %v52
    %vm55 = vcmask 125952
    %56 = vst.msk [vmem:[#allocation7] sm:$0xf] %vm55, %v53
    %57 = vst.msk [vmem:[#allocation7 + $0x4] sm:$0xf] %vm55, %v54
    %v58 = vld [vmem:[#allocation5] sm:$0xf]
    %v59 = vld [vmem:[#allocation5 + $0x4] sm:$0xf]
    %v60 = vld [vmem:[%s2] sm:$0x1]
    %v62 = vperm.slane %v60, 0
    %v66 = vunpack.c.l.b16 %v53
    %v67 = vunpack.c.l.b16 %v54
    %v68 = vpack.c.b16 %v67, %v66
    %v71 = vunpack.c.l.b16 %v58
    %v72 = vunpack.c.l.b16 %v59
    %v73 = vpack.c.b16 %v72, %v71
    %vm75 = vcmask 130048
    %v77 = vsel %vm75, %v68, 0
    %79 = vmatpush.bf16.msra.mxu0 0
    %80 = vmatpush.bf16.msra.mxu0 0
    %81 = vmatpush.bf16.msra.mxu0 0
    %82 = vmatpush.bf16.msra.mxu0 0
    %83 = vmatpush.bf16.msra.mxu0 0
    %84 = vmatpush.bf16.msra.mxu0 0
    %85 = vmatpush.bf16.msra.mxu0 0
    %86 = vmatpush.bf16.msra.mxu0 %v73
    %87 = vmatmul.bf16.gmra.mxu0 %v77
    %v88 = vpop.f32.mrf.mxu0
    %v89 = vadd.f32 %v62, %v88
    %v90 = vpop.f32.mrf.mxu0
    %v91 = vadd.f32 %v62, %v90
    %92 = vdwg.mxu0
    %v93 = vadd.f32 %v89, %v91
    %v94 = vrot.slane %v93, 4
    %v95 = vadd.f32 %v93, %v94
    %v96 = vrot.slane %v95, 2
    %v97 = vadd.f32 %v95, %v96
    %v98 = vrot.slane %v97, 1
    %v99 = vadd.f32 %v97, %v98
    %100 = vst [vmem:[#allocation8] sm:$0x1] %v99
    %v101 = vmul.f32 %v89, %v89
    %v102 = vmul.f32 %v91, %v91
    %v103 = vadd.f32 %v101, %v102
    %v104 = vrot.slane %v103, 4
    %v105 = vadd.f32 %v103, %v104
    %v106 = vrot.slane %v105, 2
    %v107 = vadd.f32 %v105, %v106
    %v108 = vrot.slane %v107, 1
    %v109 = vadd.f32 %v107, %v108
    %110 = vst [vmem:[#allocation8 + $0x1] sm:$0x1] %v109
    // Predicated region
    $region22: #{tpu_custom_call.1} parent=1 // pred_check
      _
    $region23: #{tpu_custom_call.1} parent=1 // pred_check_branch
      %112 = sbr.rel (0) target = $region25
    $region24: #{tpu_custom_call.1} parent=1 // pred_region
      %114 = vsyncadd [#allocation4], 0
      %s115 = sshll.u32 [#allocation7], 4
      %s116 = int_to_ptr.vmem [resolvable:$true] %s115
      %s117 = sshll.u32 %s3, 4
      %s118 = int_to_ptr.hbm [resolvable:$true] %s117
      %123 = dma.vmem_to_hbm [thread:$0]  %s116, 128, %s118, [#allocation4], 64, 64, 4
    $region25: #{tpu_custom_call.1} parent=1 // pred_fallthru
      _
    // Predicated region
    $region26: #{tpu_custom_call.1} parent=1 // pred_check
      _
    $region27: #{tpu_custom_call.1} parent=1 // pred_check_branch
      %125 = sbr.rel (0) target = $region29
    $region28: #{tpu_custom_call.1} parent=1 // pred_region
      %127 = vsyncadd [#allocation9], 0
      %s129 = sshll.u32 [#allocation8], 4
      %s130 = int_to_ptr.vmem [resolvable:$true] %s129
      %s131 = sshll.u32 %s4, 4
      %s132 = int_to_ptr.hbm [resolvable:$true] %s131
      %134 = dma.vmem_to_hbm [thread:$0]  %s130, 32, %s132, [#allocation9]
    $region29: #{tpu_custom_call.1} parent=1 // pred_fallthru
      _
    // Predicated region
    $region30: #{tpu_custom_call.1} parent=1 // pred_check
      _
    $region31: #{tpu_custom_call.1} parent=1 // pred_check_branch
      %136 = sbr.rel (0) target = $region33
    $region32: #{tpu_custom_call.1} parent=1 // pred_region
      %138 = dma.done [#allocation4], 128
    $region33: #{tpu_custom_call.1} parent=1 // pred_fallthru
      _
    // Predicated region
    $region34: #{tpu_custom_call.1} parent=1 // pred_check
      _
    $region35: #{tpu_custom_call.1} parent=1 // pred_check_branch
      %140 = sbr.rel (0) target = $region37
    $region36: #{tpu_custom_call.1} parent=1 // pred_region
      %142 = dma.done [#allocation9], 32
    $region37: #{tpu_custom_call.1} parent=1 // pred_fallthru
      _
    %143 = vsyncpa [#allocation3], 1
    %144 = vsyncpa [#allocation6], 1
    %145 = vsyncpa [#allocation4], 1
    %146 = vsyncpa [#allocation9], 1

</llo_original>
